<compile_context>
chip_gen: v7x
topology: tpu7x:2x2x1
jax: 0.10.0
libtpu: 0.0.40
codegen_flags: <defaults>
</compile_context>

<pallas_src>
import functools

import jax
import jax.numpy as jnp
from jax.experimental import pallas as pl
from jax.experimental.pallas import tpu as pltpu

EPS = 1e-5
LANE = 128
SUBLANE = 8


def _round_up(x, m):
    return (x + m - 1) // m * m


def _cdiv(a, b):
    return -(-a // b)


def _prenorm_linear_kernel(x_ref, gamma_ref, beta_ref, w_ref, b_ref, o_ref, *,
                           d_valid):
    # x_ref: (tr, Dp); gamma/beta: (1, Dp); w_ref: (Dp, tn); b_ref: (1, tn)
    x = x_ref[...].astype(jnp.float32)
    d_pad = x.shape[-1]

    # --- LayerNorm stats in f32 ---
    if d_valid == d_pad:
        mean = jnp.mean(x, axis=-1, keepdims=True)
        xc = x - mean
        var = jnp.mean(xc * xc, axis=-1, keepdims=True)
    else:
        # Two-moment form over the zero-padded x: padded columns contribute 0
        # to both sums, so no iota/where masking is needed. (Mild cancellation
        # risk for huge-mean inputs; fine in f32 for LayerNorm-scale data.)
        inv_d = 1.0 / d_valid
        s1 = jnp.sum(x, axis=-1, keepdims=True)
        s2 = jnp.sum(x * x, axis=-1, keepdims=True)
        mean = s1 * inv_d
        var = jnp.maximum(s2 * inv_d - mean * mean, 0.0)
        xc = x - mean

    inv = jax.lax.rsqrt(var + EPS)
    # gamma/beta are zero-padded, so padded columns of y are exactly 0 (padded
    # rows of W are also 0 -> padding never perturbs the matmul).
    y = (xc * inv) * gamma_ref[...].astype(jnp.float32) \
        + beta_ref[...].astype(jnp.float32)

    # --- fn: Linear. Feed the MXU in the weight's native dtype (bf16-friendly
    # when the caller opts in), accumulate in f32. ---
    out = jnp.dot(y.astype(w_ref.dtype), w_ref[...],
                  preferred_element_type=jnp.float32)
    out = out + b_ref[...].astype(jnp.float32)
    o_ref[...] = out.astype(o_ref.dtype)


def prenorm_linear(x, gamma, beta, w_t, b, *, tile_rows=256, tile_n=None,
                   max_w_tile_bytes=16 * 1024 * 1024, matmul_dtype=None):
    """PreNorm(dim, nn.Linear(D, D_out), norm='layer')(x).

    x: [B, N, D]; gamma, beta: [D]; w_t: [D, D_out] (torch weight transposed);
    b: [D_out]. `matmul_dtype` (e.g. jnp.bfloat16) optionally downcasts the MXU
    operands (f32 accumulation kept) -- faster on v6e/v7x, slightly different
    numerics from the f32 reference. tile_rows=512 is worth sweeping on
    v5e/v6e (128 MiB VMEM); 256 is the safe cross-generation default.
    """
    B, N, D = x.shape
    D_out = w_t.shape[1]
    R = B * N

    if matmul_dtype is not None:
        w_t = w_t.astype(matmul_dtype)

    # Lane-dense feature dims (pad only when needed).
    Dp = _round_up(D, LANE)
    Np = _round_up(D_out, LANE)

    x2 = x.reshape(R, D)
    if Dp != D:
        x2 = jnp.pad(x2, ((0, 0), (0, Dp - D)))
        gamma2 = jnp.pad(gamma, (0, Dp - D)).reshape(1, Dp)
        beta2 = jnp.pad(beta, (0, Dp - D)).reshape(1, Dp)
    else:
        gamma2 = gamma.reshape(1, Dp)
        beta2 = beta.reshape(1, Dp)
    if (Dp, Np) != (D, D_out):
        w2 = jnp.pad(w_t, ((0, Dp - D), (0, Np - D_out)))
    else:
        w2 = w_t
    b2 = (jnp.pad(b, (0, Np - D_out)) if Np != D_out else b).reshape(1, Np)

    # Row tile: multiple of 8 sublanes, no bigger than the data; keep >= 2
    # row-grid steps when possible so v7x's 2 TensorCores both get work.
    # No row padding: Pallas masks the partial last block.
    tr = _round_up(max(1, min(tile_rows, R)), SUBLANE)
    if R > SUBLANE and _cdiv(R, tr) < 2:
        tr = _round_up(_cdiv(R, 2), SUBLANE)
    num_row = _cdiv(R, tr)

    # N tile: keep W fully resident when it fits comfortably single-buffered,
    # otherwise tile D_out so the W slab stays under max_w_tile_bytes.
    x_item = jnp.dtype(x.dtype).itemsize
    w_item = jnp.dtype(w2.dtype).itemsize
    if tile_n is None:
        if Dp * Np * w_item <= max_w_tile_bytes:
            tn = Np
        else:
            tn = max(LANE, (max_w_tile_bytes // (Dp * w_item)) // LANE * LANE)
            tn = min(tn, Np)
    else:
        tn = min(_round_up(tile_n, LANE), Np)
    num_n = _cdiv(Np, tn)
    w_single = (num_n == 1)   # constant index_map -> single-buffer

    # VMEM footprint estimate -> per-shape vmem limit (not 100% of v7x VMEM).
    g_item = jnp.dtype(gamma2.dtype).itemsize
    bi_item = jnp.dtype(b2.dtype).itemsize
    est = (2 * tr * Dp * x_item                       # x (double-buffered)
           + 2 * tr * tn * x_item                     # out (double-buffered)
           + (1 if w_single else 2) * Dp * tn * w_item
           + 2 * Dp * g_item                          # gamma + beta (single)
           + (1 if w_single else 2) * tn * bi_item
           + 4 * tr * Dp * 4 + 2 * tr * tn * 4)       # f32 temporaries (rough)
    vmem_limit = int(min(max(est * 3 // 2 + (2 << 20), 16 << 20), 96 << 20))

    cost = pl.CostEstimate(
        flops=2 * R * D * D_out + 8 * R * D,
        transcendentals=0,
        bytes_accessed=(x2.size * x_item + w2.size * w_item
                        + gamma2.size * g_item + beta2.size * g_item
                        + b2.size * bi_item + R * Np * x_item),
    )

    def _spec(shape, index_map, single_buffer):
        if single_buffer:
            return pl.BlockSpec(shape, index_map, pipeline_mode=pl.Buffered(1))
        return pl.BlockSpec(shape, index_map)

    in_specs = [
        pl.BlockSpec((tr, Dp), lambda i, j: (i, 0)),            # x row tile
        _spec((1, Dp), lambda i, j: (0, 0), True),              # gamma (resident)
        _spec((1, Dp), lambda i, j: (0, 0), True),              # beta  (resident)
        _spec((Dp, tn), lambda i, j: (0, j), w_single),          # W^T tile
        _spec((1, tn), lambda i, j: (0, j), w_single),           # bias tile
    ]
    out_specs = pl.BlockSpec((tr, tn), lambda i, j: (i, j))

    kernel = functools.partial(_prenorm_linear_kernel, d_valid=D)

    out2 = pl.pallas_call(
        kernel,
        out_shape=jax.ShapeDtypeStruct((R, Np), x.dtype),
        grid=(num_row, num_n),
        in_specs=in_specs,
        out_specs=out_specs,
        compiler_params=pltpu.CompilerParams(
            dimension_semantics=("parallel", "parallel"),
            vmem_limit_bytes=vmem_limit,
        ),
        cost_estimate=cost,
    )(x2, gamma2, beta2, w2, b2)

    out = out2 if Np == D_out else out2[:, :D_out]
    return out.reshape(B, N, D_out)


def prenorm_linear_ref(x, gamma, beta, w_t, b):
    x32 = x.astype(jnp.float32)
    mean = jnp.mean(x32, axis=-1, keepdims=True)
    var = jnp.mean((x32 - mean) ** 2, axis=-1, keepdims=True)
    xhat = (x32 - mean) * jax.lax.rsqrt(var + EPS)
    y = xhat * gamma + beta
    return (y @ w_t.astype(jnp.float32) + b).astype(x.dtype)


if __name__ == "__main__":
    key = jax.random.PRNGKey(0)
    B, N, D = 2, 8, 32   # batch, seq, feature (dim of PreNorm)
    D_out = 32           # fn = nn.Linear(D, D_out)

    kx, kg, kb, kw, kbias, kw2, kb2 = jax.random.split(key, 7)
    x = jax.random.normal(kx, (B, N, D), dtype=jnp.float32)

    # LayerNorm params (perturbed from PyTorch defaults to exercise the affine path).
    gamma = 1.0 + 0.1 * jax.random.normal(kg, (D,), dtype=jnp.float32)
    beta = 0.1 * jax.random.normal(kb, (D,), dtype=jnp.float32)

    # fn = Linear(D, D_out): weight stored pre-transposed (D, D_out), bias (D_out,)
    w_t = jax.random.normal(kw, (D, D_out), dtype=jnp.float32) * (1.0 / jnp.sqrt(D))
    b = 0.01 * jax.random.normal(kbias, (D_out,), dtype=jnp.float32)

    # 1) Basic check.
    out = jax.block_until_ready(prenorm_linear(x, gamma, beta, w_t, b))
    ref = prenorm_linear_ref(x, gamma, beta, w_t, b)
    assert out.shape == (B, N, D_out)
    assert jnp.allclose(out, ref, atol=1e-4, rtol=1e-4)

    # 2) Row count not a multiple of sublane/tile: exercises the masked partial
    #    last row block (no wrapper-side row padding anymore).
    x_odd = jax.random.normal(jax.random.PRNGKey(1), (3, 5, D), dtype=jnp.float32)
    out_odd = jax.block_until_ready(prenorm_linear(x_odd, gamma, beta, w_t, b))
    ref_odd = prenorm_linear_ref(x_odd, gamma, beta, w_t, b)
    assert out_odd.shape == (3, 5, D_out)
    assert jnp.allclose(out_odd, ref_odd, atol=1e-4, rtol=1e-4)

    # 3) Force the N-tiled (large-weight) path: D_out=256 with tile_n=128 -> 2 N tiles.
    D_big = 256
    w_big = jax.random.normal(kw2, (D, D_big), dtype=jnp.float32) * (1.0 / jnp.sqrt(D))
    b_big = 0.01 * jax.random.normal(kb2, (D_big,), dtype=jnp.float32)
    out_big = jax.block_until_ready(
        prenorm_linear(x, gamma, beta, w_big, b_big, tile_n=128))
    ref_big = prenorm_linear_ref(x, gamma, beta, w_big, b_big)
    assert out_big.shape == (B, N, D_big)
    assert jnp.allclose(out_big, ref_big, atol=1e-4, rtol=1e-4)

    # 4) Opt-in bf16 MXU path (numerics intentionally differ; loose tolerance).
    out_bf = jax.block_until_ready(
        prenorm_linear(x, gamma, beta, w_t, b, matmul_dtype=jnp.bfloat16))
    assert out_bf.shape == (B, N, D_out)
    assert jnp.allclose(out_bf, ref, atol=5e-2, rtol=5e-2)

    print("KERNEL_OK")
</pallas_src>

<mosaic_0001>
module attributes {stable_mosaic.version = 11 : i64} {
  func.func @_prenorm_linear_kernel(%arg0: i32, %arg1: i32, %arg2: memref<8x128xf32, #tpu.memory_space<vmem>>, %arg3: memref<1x128xf32, #tpu.memory_space<vmem>>, %arg4: memref<1x128xf32, #tpu.memory_space<vmem>>, %arg5: memref<128x128xf32, #tpu.memory_space<vmem>>, %arg6: memref<1x128xf32, #tpu.memory_space<vmem>>, %arg7: memref<8x128xf32, #tpu.memory_space<vmem>>) attributes {dimension_semantics = [#tpu.dimension_semantics<parallel>, #tpu.dimension_semantics<parallel>], iteration_bounds = array<i64: 2, 1>, scalar_prefetch = 0 : i64, scratch_operands = 0 : i64, tpu.core_type = #tpu.core_type<tc>, window_params = [{transform_indices = @transform_0, window_bounds = array<i64: 8, 128>}, {pipeline_mode = #tpu.pipeline_mode<synchronous>, transform_indices = @transform_1, window_bounds = array<i64: 1, 128>}, {pipeline_mode = #tpu.pipeline_mode<synchronous>, transform_indices = @transform_2, window_bounds = array<i64: 1, 128>}, {pipeline_mode = #tpu.pipeline_mode<synchronous>, transform_indices = @transform_3, window_bounds = array<i64: 128, 128>}, {pipeline_mode = #tpu.pipeline_mode<synchronous>, transform_indices = @transform_4, window_bounds = array<i64: 1, 128>}, {transform_indices = @transform_5, window_bounds = array<i64: 8, 128>}]} {
    %c0 = arith.constant 0 : index
    %c0_0 = arith.constant 0 : index
    %0 = vector.load %arg2[%c0, %c0_0] : memref<8x128xf32, #tpu.memory_space<vmem>>, vector<8x128xf32>
    %cst = arith.constant dense<0.000000e+00> : vector<8xf32>
    %1 = vector.multi_reduction <add>, %0, %cst [1] : vector<8x128xf32> to vector<8xf32>
    %2 = vector.shape_cast %1 : vector<8xf32> to vector<8x1xf32>
    %3 = arith.mulf %0, %0 : vector<8x128xf32>
    %cst_1 = arith.constant dense<0.000000e+00> : vector<8xf32>
    %4 = vector.multi_reduction <add>, %3, %cst_1 [1] : vector<8x128xf32> to vector<8xf32>
    %5 = vector.shape_cast %4 : vector<8xf32> to vector<8x1xf32>
    %cst_2 = arith.constant 3.125000e-02 : f32
    %6 = vector.broadcast %cst_2 : f32 to vector<8x1xf32>
    %7 = arith.mulf %2, %6 : vector<8x1xf32>
    %cst_3 = arith.constant 3.125000e-02 : f32
    %8 = vector.broadcast %cst_3 : f32 to vector<8x1xf32>
    %9 = arith.mulf %5, %8 : vector<8x1xf32>
    %10 = arith.mulf %7, %7 : vector<8x1xf32>
    %11 = arith.subf %9, %10 : vector<8x1xf32>
    %cst_4 = arith.constant 0.000000e+00 : f32
    %12 = vector.broadcast %cst_4 : f32 to vector<8x1xf32>
    %13 = arith.maximumf %11, %12 : vector<8x1xf32>
    %14 = vector.broadcast %7 : vector<8x1xf32> to vector<8x128xf32>
    %15 = arith.subf %0, %14 : vector<8x128xf32>
    %cst_5 = arith.constant 9.99999974E-6 : f32
    %16 = vector.broadcast %cst_5 : f32 to vector<8x1xf32>
    %17 = arith.addf %13, %16 : vector<8x1xf32>
    %18 = math.rsqrt %17 : vector<8x1xf32>
    %19 = vector.broadcast %18 : vector<8x1xf32> to vector<8x128xf32>
    %20 = arith.mulf %15, %19 : vector<8x128xf32>
    %c0_6 = arith.constant 0 : index
    %c0_7 = arith.constant 0 : index
    %21 = vector.load %arg3[%c0_6, %c0_7] : memref<1x128xf32, #tpu.memory_space<vmem>>, vector<1x128xf32>
    %22 = vector.broadcast %21 : vector<1x128xf32> to vector<8x128xf32>
    %23 = arith.mulf %20, %22 : vector<8x128xf32>
    %c0_8 = arith.constant 0 : index
    %c0_9 = arith.constant 0 : index
    %24 = vector.load %arg4[%c0_8, %c0_9] : memref<1x128xf32, #tpu.memory_space<vmem>>, vector<1x128xf32>
    %25 = vector.broadcast %24 : vector<1x128xf32> to vector<8x128xf32>
    %26 = arith.addf %23, %25 : vector<8x128xf32>
    %c0_10 = arith.constant 0 : index
    %c0_11 = arith.constant 0 : index
    %27 = vector.load %arg5[%c0_10, %c0_11] : memref<128x128xf32, #tpu.memory_space<vmem>>, vector<128x128xf32>
    %cst_12 = arith.constant dense<0.000000e+00> : vector<8x128xf32>
    %28 = tpu.matmul %26, %27, %cst_12 {dimension_numbers = #tpu.dot_dimension_numbers<[1], [0], [0], [1], [0, 0, 1, 1], [], []>} : vector<8x128xf32>, vector<128x128xf32>, vector<8x128xf32> -> vector<8x128xf32>
    %c0_13 = arith.constant 0 : index
    %c0_14 = arith.constant 0 : index
    %29 = vector.load %arg6[%c0_13, %c0_14] : memref<1x128xf32, #tpu.memory_space<vmem>>, vector<1x128xf32>
    %30 = vector.broadcast %29 : vector<1x128xf32> to vector<8x128xf32>
    %31 = arith.addf %28, %30 : vector<8x128xf32>
    %c0_15 = arith.constant 0 : index
    %c0_16 = arith.constant 0 : index
    %32 = vector.load %arg7[%c0_15, %c0_16] : memref<8x128xf32, #tpu.memory_space<vmem>>, vector<8x128xf32>
    tpu.vector_store %arg7[%c0_15, %c0_16], %31 {strides = array<i32>} : memref<8x128xf32, #tpu.memory_space<vmem>>, vector<8x128xf32>,
    return
  }
  func.func @transform_0(%arg0: i32, %arg1: i32) -> (i32, i32) {
    %c0_i32 = arith.constant 0 : i32
    %c0_i32_0 = arith.constant 0 : i32
    return %arg0, %c0_i32 : i32, i32
  }
  func.func @transform_1(%arg0: i32, %arg1: i32) -> (i32, i32) {
    %c0_i32 = arith.constant 0 : i32
    %c0_i32_0 = arith.constant 0 : i32
    %c0_i32_1 = arith.constant 0 : i32
    return %c0_i32, %c0_i32_0 : i32, i32
  }
  func.func @transform_2(%arg0: i32, %arg1: i32) -> (i32, i32) {
    %c0_i32 = arith.constant 0 : i32
    %c0_i32_0 = arith.constant 0 : i32
    %c0_i32_1 = arith.constant 0 : i32
    return %c0_i32, %c0_i32_0 : i32, i32
  }
  func.func @transform_3(%arg0: i32, %arg1: i32) -> (i32, i32) {
    %c0_i32 = arith.constant 0 : i32
    %c0_i32_0 = arith.constant 0 : i32
    return %c0_i32, %arg1 : i32, i32
  }
  func.func @transform_4(%arg0: i32, %arg1: i32) -> (i32, i32) {
    %c0_i32 = arith.constant 0 : i32
    %c0_i32_0 = arith.constant 0 : i32
    return %c0_i32, %arg1 : i32, i32
  }
  func.func @transform_5(%arg0: i32, %arg1: i32) -> (i32, i32) {
    %c0_i32 = arith.constant 0 : i32
    return %arg0, %arg1 : i32, i32
  }
}

</mosaic_0001>

<llo_original>
// kernel: tpu_custom_call.1
$region0: #{tpu_custom_call.1}
  #allocation0 [shape = 'u32[]', space=smem, size = 0x4, offset = 0x4, fixed_abs, tag = 'smem constant byte address 0x4 - core index']
  #allocation1 [shape = 'u32[144,128]{1,0:T(1,128)}', space=vmem, size = 0x12000, scoped, tag = 'internal scratch']
  %s0 = inlined_call_operand.hbm [shape: f32[16,128], index: 0, kind: input, shape index: {}]
  %s1 = inlined_call_operand.vmem [shape: f32[1,128], index: 1, kind: input, shape index: {}]
  %s2 = inlined_call_operand.vmem [shape: f32[1,128], index: 2, kind: input, shape index: {}]
  %s3 = inlined_call_operand.hbm [shape: f32[128,128], index: 3, kind: input, shape index: {}]
  %s4 = inlined_call_operand.vmem [shape: f32[1,128], index: 4, kind: input, shape index: {}]
  %s5 = inlined_call_operand.hbm [shape: f32[16,128], index: 5, kind: output, shape index: {}]
  %s6 = sld [smem:[#allocation0]]
  $region61: #{tpu_custom_call.1} parent=0
    _
  %s8 = ssub.s32 1, %s6
  %s9 = scalar_select 0, %s8, %s6
  $region1: #{tpu_custom_call.1} parent=0
    #allocation2 [shape = 'u8[8192]{0}', space=vmem, size = 0x2000, scoped, tag = 'input window, operand 0']
    #allocation3 [shape = 's32[2]{0}', space=sflag, size = 0x8, scoped, tag = 'scoped memory for tpu_custom_call.1']
    #allocation4 [shape = 's32[2]{0}', space=sflag, size = 0x8, scoped, tag = 'scoped memory for tpu_custom_call.1']
    #allocation5 [shape = 'u8[65536]{0}', space=vmem, size = 0x10000, scoped, tag = 'input window, operand 3, single buffered']
    #allocation6 [shape = 's32[1]{0}', space=sflag, size = 0x4, scoped, tag = 'scoped memory for tpu_custom_call.1']
    #allocation7 [shape = 'u8[8192]{0}', space=vmem, size = 0x2000, scoped, tag = 'output window, operand 0']
    %10 = vsyncpa [#allocation3], 0
    %s11 = scalar_lea.sflag [#allocation3], 1
    %12 = vsyncpa %s11, 0
    %13 = vsyncpa [#allocation6], 0
    %14 = vsyncpa [#allocation4], 0
    %s15 = scalar_lea.sflag [#allocation4], 1
    %16 = vsyncpa %s15, 0
    loop: start=0, step=1, limit=4
    $region2: #{tpu_custom_call.1} parent=1 // loop_pre_header
      _
    $region3: #{tpu_custom_call.1} parent=1 // loop_header
      %s18 = sphi 0, %s22
      %p19 = scmp.ge.s32.totalorder %s18, 4
      %s25 = sphi 0, %s37
      %s26 = sphi 0, %s33
      %s27 = sphi 0, %s25
      %s28 = sphi 0, %s26
      %s29 = sphi 0, %s27
      %s30 = sphi 0, %s28
      %s40 = sphi 0, %s42
      %s43 = sphi 0, %s40
      %s44 = sphi 0, %s43
      %s60 = sphi 0, %s44
      %s64 = sphi 0, %s64
      %s66 = sphi 0, %s64
      %s67 = sphi 0, %s66
      %s81 = sphi 0, %s67
      %s85 = sphi 0, %s85
      %s87 = sphi 0, %s85
      %s88 = sphi 0, %s87
      %s102 = sphi 0, %s88
      %s108 = sphi 0, %s110
      %s111 = sphi 0, %s108
      %s112 = sphi 0, %s111
      %s128 = sphi 0, %s112
      %s134 = sphi 0, %s136
      %s137 = sphi 0, %s134
      %s138 = sphi 0, %s137
      %s154 = sphi 0, %s138
      %s162 = sphi 0, %s164
      %s165 = sphi 0, %s162
      %s166 = sphi 0, %s165
      %s182 = sphi 0, %s166
    $region4: #{tpu_custom_call.1} parent=1 // loop_header_branch
      %21 = sbr.rel (%p19) target = $region8
    $region5: #{tpu_custom_call.1} parent=1 // loop_body
      %s23 = ssub.s32 %s18, 1
      %s24 = ssub.s32 %s18, 2
      %s31 = sadd.s32 1, %s26
      %p32 = scmp.ge.s32.totalorder %s31, 1
      %s33 = scalar_select %p32, 0, %s31
      %s34 = sadd.s32 1, %s25
      %s35 = scalar_select %p32, %s34, %s25
      %p36 = scmp.ge.s32.totalorder %s35, 2
      %s37 = scalar_select %p36, 0, %s35
      %s38 = ssub.s32 %s25, %s37
      %p39 = scmp.eq.s32.totalorder %s38, 0
      %s41 = sadd.s32 %s40, 1
      %s42 = scalar_select %p39, %s40, %s41
      %p45 = pneg %p39
      %p46 = scmp.eq.s32.totalorder %s18, 1
      %p47 = por %p45, %p46
      %p48 = scmp.ne.s32.totalorder %s40, %s43
      %p49 = scmp.eq.s32.totalorder %s18, 0
      %p50 = por %p48, %p49
      %p51 = scmp.ne.s32.totalorder %s40, %s43
      %p52 = scmp.eq.s32.totalorder %s23, 1
      %p53 = por %p51, %p52
      %p54 = scmp.ne.s32.totalorder %s43, %s44
      %p55 = scmp.eq.s32.totalorder %s23, 0
      %p56 = por %p54, %p55
      %p57 = scmp.ne.s32.totalorder %s43, %s44
      %p58 = scmp.eq.s32.totalorder %s24, 1
      %p59 = por %p57, %p58
      %p61 = scmp.ne.s32.totalorder %s44, %s60
      %p62 = scmp.eq.s32.totalorder %s24, 0
      %p63 = por %p61, %p62
      %s65 = sadd.s32 %s64, 1
      %p68 = scmp.eq.s32.totalorder %s18, 1
      %p69 = scmp.ne.s32.totalorder %s64, %s66
      %p70 = scmp.eq.s32.totalorder %s18, 0
      %p71 = por %p69, %p70
      %p72 = scmp.ne.s32.totalorder %s64, %s66
      %p73 = scmp.eq.s32.totalorder %s23, 1
      %p74 = por %p72, %p73
      %p75 = scmp.ne.s32.totalorder %s66, %s67
      %p76 = scmp.eq.s32.totalorder %s23, 0
      %p77 = por %p75, %p76
      %p78 = scmp.ne.s32.totalorder %s66, %s67
      %p79 = scmp.eq.s32.totalorder %s24, 1
      %p80 = por %p78, %p79
      %p82 = scmp.ne.s32.totalorder %s67, %s81
      %p83 = scmp.eq.s32.totalorder %s24, 0
      %p84 = por %p82, %p83
      %s86 = sadd.s32 %s85, 1
      %p89 = scmp.eq.s32.totalorder %s18, 1
      %p90 = scmp.ne.s32.totalorder %s85, %s87
      %p91 = scmp.eq.s32.totalorder %s18, 0
      %p92 = por %p90, %p91
      %p93 = scmp.ne.s32.totalorder %s85, %s87
      %p94 = scmp.eq.s32.totalorder %s23, 1
      %p95 = por %p93, %p94
      %p96 = scmp.ne.s32.totalorder %s87, %s88
      %p97 = scmp.eq.s32.totalorder %s23, 0
      %p98 = por %p96, %p97
      %p99 = scmp.ne.s32.totalorder %s87, %s88
      %p100 = scmp.eq.s32.totalorder %s24, 1
      %p101 = por %p99, %p100
      %p103 = scmp.ne.s32.totalorder %s88, %s102
      %p104 = scmp.eq.s32.totalorder %s24, 0
      %p105 = por %p103, %p104
      %s106 = ssub.s32 %s26, %s33
      %p107 = scmp.eq.s32.totalorder %s106, 0
      %s109 = sadd.s32 %s108, 1
      %s110 = scalar_select %p107, %s108, %s109
      %p113 = pneg %p107
      %p114 = scmp.eq.s32.totalorder %s18, 1
      %p115 = por %p113, %p114
      %p116 = scmp.ne.s32.totalorder %s108, %s111
      %p117 = scmp.eq.s32.totalorder %s18, 0
      %p118 = por %p116, %p117
      %p119 = scmp.ne.s32.totalorder %s108, %s111
      %p120 = scmp.eq.s32.totalorder %s23, 1
      %p121 = por %p119, %p120
      %p122 = scmp.ne.s32.totalorder %s111, %s112
      %p123 = scmp.eq.s32.totalorder %s23, 0
      %p124 = por %p122, %p123
      %p125 = scmp.ne.s32.totalorder %s111, %s112
      %p126 = scmp.eq.s32.totalorder %s24, 1
      %p127 = por %p125, %p126
      %p129 = scmp.ne.s32.totalorder %s112, %s128
      %p130 = scmp.eq.s32.totalorder %s24, 0
      %p131 = por %p129, %p130
      %s132 = ssub.s32 %s26, %s33
      %p133 = scmp.eq.s32.totalorder %s132, 0
      %s135 = sadd.s32 %s134, 1
      %s136 = scalar_select %p133, %s134, %s135
      %p139 = pneg %p133
      %p140 = scmp.eq.s32.totalorder %s18, 1
      %p141 = por %p139, %p140
      %p142 = scmp.ne.s32.totalorder %s134, %s137
      %p143 = scmp.eq.s32.totalorder %s18, 0
      %p144 = por %p142, %p143
      %p145 = scmp.ne.s32.totalorder %s134, %s137
      %p146 = scmp.eq.s32.totalorder %s23, 1
      %p147 = por %p145, %p146
      %p148 = scmp.ne.s32.totalorder %s137, %s138
      %p149 = scmp.eq.s32.totalorder %s23, 0
      %p150 = por %p148, %p149
      %p151 = scmp.ne.s32.totalorder %s137, %s138
      %p152 = scmp.eq.s32.totalorder %s24, 1
      %p153 = por %p151, %p152
      %p155 = scmp.ne.s32.totalorder %s138, %s154
      %p156 = scmp.eq.s32.totalorder %s24, 0
      %p157 = por %p155, %p156
      %s158 = ssub.s32 %s25, %s37
      %s159 = ssub.s32 %s26, %s33
      %s160 = sor.u32 %s158, %s159
      %p161 = scmp.eq.s32.totalorder %s160, 0
      %s163 = sadd.s32 %s162, 1
      %s164 = scalar_select %p161, %s162, %s163
      %p167 = pneg %p161
      %p168 = scmp.eq.s32.totalorder %s18, 1
      %p169 = por %p167, %p168
      %p170 = scmp.ne.s32.totalorder %s162, %s165
      %p171 = scmp.eq.s32.totalorder %s18, 0
      %p172 = por %p170, %p171
      %p173 = scmp.ne.s32.totalorder %s162, %s165
      %p174 = scmp.eq.s32.totalorder %s23, 1
      %p175 = por %p173, %p174
      %p176 = scmp.ne.s32.totalorder %s165, %s166
      %p177 = scmp.eq.s32.totalorder %s23, 0
      %p178 = por %p176, %p177
      %p179 = scmp.ne.s32.totalorder %s165, %s166
      %p180 = scmp.eq.s32.totalorder %s24, 1
      %p181 = por %p179, %p180
      %p183 = scmp.ne.s32.totalorder %s166, %s182
      %p184 = scmp.eq.s32.totalorder %s24, 0
      %p185 = por %p183, %p184
      %p186 = scmp.le.s32.totalorder 1, %s18
      %p187 = scmp.lt.s32.totalorder %s18, 3
      %p188 = pnand %p186, %p187
      %p189 = pneg %p188
      // Predicated region
      $region9: #{tpu_custom_call.1} parent=5 // pred_check
        _
      $region10: #{tpu_custom_call.1} parent=5 // pred_check_branch
        %191 = sbr.rel (%p188) target = $region12
      $region11: #{tpu_custom_call.1} parent=5 // pred_region
        %s192 = ssub.s32 %s18, 1
        // Predicated region
        $region13: #{tpu_custom_call.1} parent=11 // pred_check
          %p193 = pneg %p77
        $region14: #{tpu_custom_call.1} parent=11 // pred_check_branch
          %195 = sbr.rel (%p193) target = $region16
        $region15: #{tpu_custom_call.1} parent=11 // pred_region
          _
        $region16: #{tpu_custom_call.1} parent=11 // pred_fallthru
          _
        // Predicated region
        $region17: #{tpu_custom_call.1} parent=11 // pred_check
          %p196 = pneg %p98
        $region18: #{tpu_custom_call.1} parent=11 // pred_check_branch
          %198 = sbr.rel (%p196) target = $region20
        $region19: #{tpu_custom_call.1} parent=11 // pred_region
          _
        $region20: #{tpu_custom_call.1} parent=11 // pred_fallthru
          _
        // Predicated region
        $region21: #{tpu_custom_call.1} parent=11 // pred_check
          %p199 = pneg %p124
        $region22: #{tpu_custom_call.1} parent=11 // pred_check_branch
          %201 = sbr.rel (%p199) target = $region24
        $region23: #{tpu_custom_call.1} parent=11 // pred_region
          %s203 = ssub.s32 2048, 2048
          %204 = vsyncadd [#allocation6], %s203
          %s205 = smul.addr %s28, 128
          %s206 = scalar_lea.hbm %s3, %s205
          %s207 = sshll.u32 [#allocation5], 4
          %s208 = int_to_ptr.vmem [resolvable:$true] %s207
          %213 = dma.hbm_to_vmem [thread:$0]  %s206, 2048, %s208, [#allocation6], 128, 128, 8
        $region24: #{tpu_custom_call.1} parent=11 // pred_fallthru
          _
        // Predicated region
        $region25: #{tpu_custom_call.1} parent=11 // pred_check
          %p214 = pneg %p150
        $region26: #{tpu_custom_call.1} parent=11 // pred_check_branch
          %216 = sbr.rel (%p214) target = $region28
        $region27: #{tpu_custom_call.1} parent=11 // pred_region
          %p217 = scmp.lt.s32.totalorder %s28, 0
          %s218 = scalar_select %p217, %s28, 0
          %s219 = scalar_lea.vmem %s4, %s218
        $region28: #{tpu_custom_call.1} parent=11 // pred_fallthru
          _
      $region12: #{tpu_custom_call.1} parent=5 // pred_fallthru
        _
      %p220 = scmp.lt.s32.totalorder %s18, 2
      // Predicated region
      $region29: #{tpu_custom_call.1} parent=5 // pred_check
        %p221 = pneg %p220
      $region30: #{tpu_custom_call.1} parent=5 // pred_check_branch
        %223 = sbr.rel (%p221) target = $region32
      $region31: #{tpu_custom_call.1} parent=5 // pred_region
        // Predicated region
        $region33: #{tpu_custom_call.1} parent=31 // pred_check
          %p224 = pneg %p50
        $region34: #{tpu_custom_call.1} parent=31 // pred_check_branch
          %226 = sbr.rel (%p224) target = $region36
        $region35: #{tpu_custom_call.1} parent=31 // pred_region
          %s227 = sand.u32 %s40, 1
          %s228 = scalar_lea.sflag [#allocation3], %s227
          %s229 = sand.u32 %s40, 1
          %s230 = smul.addr %s229, 8
          %s231 = scalar_lea.vmem [#allocation2], %s230
          %s233 = ssub.s32 128, 128
          %234 = vsyncadd %s228, %s233
          %s235 = smul.addr %s25, 128
          %s236 = scalar_lea.hbm %s0, %s235
          %s238 = sshll.u32 %s231, 4
          %s239 = int_to_ptr.vmem [resolvable:$true] %s238
          %241 = dma.hbm_to_vmem [thread:$0]  %s236, 128, %s239, %s228
        $region36: #{tpu_custom_call.1} parent=31 // pred_fallthru
          _
      $region32: #{tpu_custom_call.1} parent=5 // pred_fallthru
        _
      %p242 = scmp.le.s32.totalorder 1, %s18
      %p243 = scmp.lt.s32.totalorder %s18, 3
      %p244 = pnand %p242, %p243
      %p245 = pneg %p244
      // Predicated region
      $region37: #{tpu_custom_call.1} parent=5 // pred_check
        _
      $region38: #{tpu_custom_call.1} parent=5 // pred_check_branch
        %247 = sbr.rel (%p244) target = $region40
      $region39: #{tpu_custom_call.1} parent=5 // pred_region
        %s248 = ssub.s32 %s18, 1
        %s249 = sand.u32 %s43, 1
        %s250 = scalar_lea.sflag [#allocation3], %s249
        %s251 = sand.u32 %s43, 1
        %s252 = smul.addr %s251, 8
        %s253 = scalar_lea.vmem [#allocation2], %s252
        // Predicated region
        $region41: #{tpu_custom_call.1} parent=39 // pred_check
          %p254 = pneg %p56
        $region42: #{tpu_custom_call.1} parent=39 // pred_check_branch
          %256 = sbr.rel (%p254) target = $region44
        $region43: #{tpu_custom_call.1} parent=39 // pred_region
          %257 = dma.done %s250, 128
        $region44: #{tpu_custom_call.1} parent=39 // pred_fallthru
          _
        // Predicated region
        $region45: #{tpu_custom_call.1} parent=39 // pred_check
          %p258 = pneg %p124
        $region46: #{tpu_custom_call.1} parent=39 // pred_check_branch
          %260 = sbr.rel (%p258) target = $region48
        $region47: #{tpu_custom_call.1} parent=39 // pred_region
          %261 = dma.done [#allocation6], 2048
        $region48: #{tpu_custom_call.1} parent=39 // pred_fallthru
          _
        %s262 = sand.u32 %s43, 1
        %s263 = scalar_lea.sflag [#allocation3], %s262
        %s264 = sand.u32 %s43, 1
        %s265 = smul.addr %s264, 8
        %s266 = scalar_lea.vmem [#allocation2], %s265
        %p267 = pneg %p56
        %p268 = pneg %p53
        %p269 = pneg %p77
        %p270 = pneg %p74
        %p271 = pneg %p98
        %p272 = pneg %p95
        %p273 = pneg %p124
        %p274 = pneg %p121
        %p275 = scmp.lt.s32.totalorder %s28, 0
        %s276 = scalar_select %p275, %s28, 0
        %s277 = scalar_lea.vmem %s4, %s276
        %p278 = pneg %p150
        %p279 = pneg %p147
        %p280 = pneg %p178
        %p281 = pneg %p175
        %s282 = sand.u32 %s165, 1
        %s283 = scalar_lea.sflag [#allocation4], %s282
        %s284 = sand.u32 %s165, 1
        %s285 = smul.addr %s284, 8
        %s286 = scalar_lea.vmem [#allocation7], %s285
        %p287 = scmp.lt.s32.totalorder %s28, 0
        %s288 = scalar_select %p287, %s28, 0
        %s289 = scalar_lea.vmem %s4, %s288
        %v290 = vld [vmem:[%s253] sm:$0xff]
        %291 = vadd.xlane.f32.xlu0 %v290
        %v292 = vpop.xlane.xlu0 %291
        %v293 = vmul.f32 %v290, %v290
        %294 = vadd.xlane.f32.xlu0 %v293
        %v295 = vpop.xlane.xlu0 %294
        %v296 = vmul.f32 %v292, 0.03125
        %v297 = vmul.f32 %v295, 0.03125
        %v298 = vmul.f32 %v296, %v296
        %v299 = vsub.f32 %v297, %v298
        %v300 = vmax.f32 %v299, 0.0
        %v301 = vsub.f32 %v290, %v296
        %v302 = vadd.f32 %v300, 1e-05
        %v303 = vrsqrt.pop %v302
        %v304 = vmul.f32 %v301, %v303
        %v305 = vld [vmem:[%s1] sm:$0x1]
        %v307 = vlaneseq
        %v308 = vshrl.u32 %v307, 7
        %v309 = vsub.s32 0, %v308
        %v310 = vrot.slane %v305, %v309
        %v312 = vmul.f32 %v304, %v310
        %v313 = vld [vmem:[%s2] sm:$0x1]
        %v315 = vlaneseq
        %v316 = vshrl.u32 %v315, 7
        %v317 = vsub.s32 0, %v316
        %v318 = vrot.slane %v313, %v317
        %v320 = vadd.f32 %v312, %v318
        %v321 = vld [vmem:[#allocation5] sm:$0xff]
        %v322 = vld [vmem:[#allocation5 + $0x8] sm:$0xff]
        %v323 = vld [vmem:[#allocation5 + $0x10] sm:$0xff]
        %v324 = vld [vmem:[#allocation5 + $0x18] sm:$0xff]
        %v325 = vld [vmem:[#allocation5 + $0x20] sm:$0xff]
        %v326 = vld [vmem:[#allocation5 + $0x28] sm:$0xff]
        %v327 = vld [vmem:[#allocation5 + $0x30] sm:$0xff]
        %v328 = vld [vmem:[#allocation5 + $0x38] sm:$0xff]
        %v329 = vld [vmem:[#allocation5 + $0x40] sm:$0xff]
        %v330 = vld [vmem:[#allocation5 + $0x48] sm:$0xff]
        %v331 = vld [vmem:[#allocation5 + $0x50] sm:$0xff]
        %v332 = vld [vmem:[#allocation5 + $0x58] sm:$0xff]
        %v333 = vld [vmem:[#allocation5 + $0x60] sm:$0xff]
        %v334 = vld [vmem:[#allocation5 + $0x68] sm:$0xff]
        %v335 = vld [vmem:[#allocation5 + $0x70] sm:$0xff]
        %v336 = vld [vmem:[#allocation5 + $0x78] sm:$0xff]
        %v337 = vld [vmem:[%s289] sm:$0x1]
        %v339 = vlaneseq
        %v340 = vshrl.u32 %v339, 7
        %v341 = vsub.s32 0, %v340
        %v342 = vrot.slane %v337, %v341
        %344 = vmatprep.subr.mxu0 0.0
        %345 = vmatpush1.msra.mxu0 %v321
        %346 = vmatprep.subr.mxu0 0.0
        %347 = vmatpush1.msra.mxu0 %v322
        %348 = vmatprep.subr.mxu0 0.0
        %349 = vmatpush1.msra.mxu0 %v323
        %350 = vmatprep.subr.mxu0 0.0
        %351 = vmatpush1.msra.mxu0 %v324
        %352 = vmatprep.subr.mxu0 0.0
        %353 = vmatpush1.msra.mxu0 %v325
        %354 = vmatprep.subr.mxu0 0.0
        %355 = vmatpush1.msra.mxu0 %v326
        %356 = vmatprep.subr.mxu0 0.0
        %357 = vmatpush1.msra.mxu0 %v327
        %358 = vmatprep.subr.mxu0 0.0
        %359 = vmatpush1.msra.mxu0 %v328
        %360 = vmatprep.subr.mxu0 0.0
        %361 = vmatpush1.msra.mxu0 %v329
        %362 = vmatprep.subr.mxu0 0.0
        %363 = vmatpush1.msra.mxu0 %v330
        %364 = vmatprep.subr.mxu0 0.0
        %365 = vmatpush1.msra.mxu0 %v331
        %366 = vmatprep.subr.mxu0 0.0
        %367 = vmatpush1.msra.mxu0 %v332
        %368 = vmatprep.subr.mxu0 0.0
        %369 = vmatpush1.msra.mxu0 %v333
        %370 = vmatprep.subr.mxu0 0.0
        %371 = vmatpush1.msra.mxu0 %v334
        %372 = vmatprep.subr.mxu0 0.0
        %373 = vmatpush1.msra.mxu0 %v335
        %374 = vmatprep.subr.mxu0 0.0
        %375 = vmatpush1.msra.mxu0 %v336
        %376 = vmatprep.subr.mxu0 0.0
        %377 = vmatpush1.msra.mxu0 0.0
        %378 = vmatprep.subr.mxu0 0.0
        %379 = vmatpush1.msra.mxu0 0.0
        %380 = vmatprep.subr.mxu0 0.0
        %381 = vmatpush1.msra.mxu0 0.0
        %382 = vmatprep.subr.mxu0 0.0
        %383 = vmatpush1.msra.mxu0 0.0
        %384 = vmatprep.subr.mxu0 0.0
        %385 = vmatpush1.msra.mxu0 0.0
        %386 = vmatprep.subr.mxu0 0.0
        %387 = vmatpush1.msra.mxu0 0.0
        %388 = vmatprep.subr.mxu0 0.0
        %389 = vmatpush1.msra.mxu0 0.0
        %390 = vmatprep.subr.mxu0 0.0
        %391 = vmatpush1.msra.mxu0 0.0
        %392 = vmatprep.subr.mxu0 0.0
        %393 = vmatpush1.msra.mxu0 0.0
        %394 = vmatprep.subr.mxu0 0.0
        %395 = vmatpush1.msra.mxu0 0.0
        %396 = vmatprep.subr.mxu0 0.0
        %397 = vmatpush1.msra.mxu0 0.0
        %398 = vmatprep.subr.mxu0 0.0
        %399 = vmatpush1.msra.mxu0 0.0
        %400 = vmatprep.subr.mxu0 0.0
        %401 = vmatpush1.msra.mxu0 0.0
        %402 = vmatprep.subr.mxu0 0.0
        %403 = vmatpush1.msra.mxu0 0.0
        %404 = vmatprep.subr.mxu0 0.0
        %405 = vmatpush1.msra.mxu0 0.0
        %406 = vmatprep.subr.mxu0 0.0
        %407 = vmatpush1.msra.mxu0 0.0
        %408 = vmatprep.mubr.f32.mxu0 0.0
        %409 = vmatmul.mubr.f32.gmra.mrb[0].mxu0 %v320
        %v410 = vpop.f32.mrb[0].mxu0
        %v411 = vadd.f32 %v342, %v410
        %v412 = vpop.f32.mrb[0].mxu0
        %413 = vdwg.mxu0
        %414 = vst [vmem:[%s286] sm:$0xff] %v411
        %s415 = sand.u32 %s165, 1
        %s416 = scalar_lea.sflag [#allocation4], %s415
        %s417 = sand.u32 %s165, 1
        %s418 = smul.addr %s417, 8
        %s419 = scalar_lea.vmem [#allocation7], %s418
        // Predicated region
        $region49: #{tpu_custom_call.1} parent=39 // pred_check
          %p420 = pneg %p175
        $region50: #{tpu_custom_call.1} parent=39 // pred_check_branch
          %422 = sbr.rel (%p420) target = $region52
        $region51: #{tpu_custom_call.1} parent=39 // pred_region
          %s424 = ssub.s32 128, 128
          %425 = vsyncadd %s416, %s424
          %s426 = sadd.s32 %s28, %s27
          %s427 = smul.addr %s426, 128
          %s428 = scalar_lea.hbm %s5, %s427
          %s430 = sshll.u32 %s419, 4
          %s431 = int_to_ptr.vmem [resolvable:$true] %s430
          %433 = dma.vmem_to_hbm [thread:$0]  %s431, 128, %s428, %s416
        $region52: #{tpu_custom_call.1} parent=39 // pred_fallthru
          _
      $region40: #{tpu_custom_call.1} parent=5 // pred_fallthru
        _
      %p434 = scmp.le.s32.totalorder 2, %s18
      // Predicated region
      $region53: #{tpu_custom_call.1} parent=5 // pred_check
        %p435 = pneg %p434
      $region54: #{tpu_custom_call.1} parent=5 // pred_check_branch
        %437 = sbr.rel (%p435) target = $region56
      $region55: #{tpu_custom_call.1} parent=5 // pred_region
        %s438 = ssub.s32 %s18, 2
        // Predicated region
        $region57: #{tpu_custom_call.1} parent=55 // pred_check
          %p439 = pneg %p181
        $region58: #{tpu_custom_call.1} parent=55 // pred_check_branch
          %441 = sbr.rel (%p439) target = $region60
        $region59: #{tpu_custom_call.1} parent=55 // pred_region
          %s442 = sand.u32 %s166, 1
          %s443 = scalar_lea.sflag [#allocation4], %s442
          %s444 = sand.u32 %s166, 1
          %s445 = smul.addr %s444, 8
          %s446 = scalar_lea.vmem [#allocation7], %s445
          %447 = dma.done %s443, 128
        $region60: #{tpu_custom_call.1} parent=55 // pred_fallthru
          _
      $region56: #{tpu_custom_call.1} parent=5 // pred_fallthru
        _
    $region6: #{tpu_custom_call.1} parent=1 // loop_footer
      %s22 = sadd.s32 1, %s18
    $region7: #{tpu_custom_call.1} parent=1 // loop_footer_branch
      %17 = sbr.rel target = $region3
    $region8: #{tpu_custom_call.1} parent=1 // loop_exit
      _
    %448 = vsyncpa [#allocation3], 1
    %s449 = scalar_lea.sflag [#allocation3], 1
    %450 = vsyncpa %s449, 1
    %451 = vsyncpa [#allocation6], 1
    %452 = vsyncpa [#allocation4], 1
    %s453 = scalar_lea.sflag [#allocation4], 1
    %454 = vsyncpa %s453, 1

</llo_original>
